<compile_context>
chip_gen: v5e
topology: v5e:2x2
jax: 0.10.0
libtpu: 0.0.40
codegen_flags: <defaults>
</compile_context>

<pallas_src>
import jax
import jax.numpy as jnp
from jax.experimental import pallas as pl
from jax.experimental.pallas import tpu as pltpu


# ---------------------------------------------------------------------------
# Small helpers
# ---------------------------------------------------------------------------
def _round_up(x, m):
    return (x + m - 1) // m * m


def _vmem_caps():
    """(tile-selection budget, vmem_limit_bytes), generation-aware."""
    cap = 64 * 1024 * 1024                     # conservative default (v7x VMEM)
    try:
        info = pltpu.get_tpu_info()
        cap = int(getattr(info, "vmem_capacity_bytes", cap))
    except Exception:
        pass
    budget = max(cap // 2 - 8 * 1024 * 1024, 16 * 1024 * 1024)
    limit = max(min((cap * 3) // 4, cap - 8 * 1024 * 1024),
                budget + 8 * 1024 * 1024)
    return budget, limit


def _fold_bn(bn, eps=1e-5):
    gamma, beta, mean, var = bn
    scale = gamma / jnp.sqrt(var + eps)
    bias = beta - mean * scale
    return (scale.reshape(1, -1).astype(jnp.float32),
            bias.reshape(1, -1).astype(jnp.float32))


# ---------------------------------------------------------------------------
# Kernel A: implicit-im2col 3x3 stride-1 conv + folded BN (+residual)(+ReLU)
#   grid = (N,), one padded image per step; 9 tap slices -> 9 MXU matmuls.
# ---------------------------------------------------------------------------
def _make_implicit_conv_kernel(apply_relu: bool, has_residual: bool):
    def kernel(*refs):
        if has_residual:
            x_ref, w_ref, s_ref, b_ref, r_ref, o_ref = refs
        else:
            x_ref, w_ref, s_ref, b_ref, o_ref = refs

        Hp, Wp, Cin = x_ref.shape
        Ho, Wo = Hp - 2, Wp - 2

        x = x_ref[...]                                   # (Hp, Wp, Cin) bf16
        acc = None
        for dy in range(3):
            for dx in range(3):
                # Tap view = contiguous slice of the padded image (no 9x blowup).
                lhs = x[dy:dy + Ho, dx:dx + Wo, :].reshape(Ho * Wo, Cin)
                part = jnp.dot(lhs, w_ref[dy * 3 + dx],  # (Cin, Cout_pad) bf16
                               preferred_element_type=jnp.float32)
                acc = part if acc is None else acc + part

        # Folded BatchNorm (inference) epilogue in f32.
        y = acc * s_ref[...] + b_ref[...]
        if has_residual:
            y = y + r_ref[...].astype(jnp.float32)       # bf16 residual, f32 add
        if apply_relu:
            y = jnp.maximum(y, 0.0)
        o_ref[...] = y.astype(o_ref.dtype)               # lane-dense bf16 store

    return kernel


def _implicit_vmem_bytes(Hp, Wp, Cin, Ho, Wo, Cout_pad, has_res):
    x_buf = Hp * _round_up(Wp, 8) * _round_up(Cin, 128) * 2   # bf16 image tile
    out_buf = _round_up(Ho * Wo, 8) * Cout_pad * 2            # bf16 out tile
    res_buf = out_buf if has_res else 0
    w_buf = 9 * _round_up(Cin, 8) * Cout_pad * 2
    acc_live = 2 * Ho * Wo * Cout_pad * 4                     # f32 temporaries
    return (2 * (x_buf + out_buf + res_buf)                   # double-buffered
            + w_buf + acc_live + 4 * Cout_pad * 4)


def _conv3x3_s1_bn_pallas(x_nhwc, w_hwio, bn, *, apply_relu, residual,
                          out_dtype, vmem_limit):
    N, H, W, Cin = x_nhwc.shape
    Cout = w_hwio.shape[-1]
    Ho, Wo = H, W
    Hp, Wp = H + 2, W + 2
    Cout_pad = _round_up(Cout, 128)

    xp = jnp.pad(x_nhwc.astype(jnp.bfloat16),
                 ((0, 0), (1, 1), (1, 1), (0, 0)))               # spatial pad only
    w = jnp.pad(w_hwio.astype(jnp.bfloat16).reshape(9, Cin, Cout),
                ((0, 0), (0, 0), (0, Cout_pad - Cout)))
    scale, bias = _fold_bn(bn)
    scale = jnp.pad(scale, ((0, 0), (0, Cout_pad - Cout)), constant_values=1.0)
    bias = jnp.pad(bias, ((0, 0), (0, Cout_pad - Cout)))

    has_res = residual is not None
    args = [xp, w, scale, bias]
    in_specs = [
        pl.BlockSpec((None, Hp, Wp, Cin), lambda n: (n, 0, 0, 0)),   # one image
        pl.BlockSpec((9, Cin, Cout_pad), lambda n: (0, 0, 0)),       # weights, VMEM-resident
        pl.BlockSpec((1, Cout_pad), lambda n: (0, 0)),               # BN scale
        pl.BlockSpec((1, Cout_pad), lambda n: (0, 0)),               # BN bias
    ]
    if has_res:
        res = residual.reshape(N, Ho * Wo, Cout).astype(jnp.bfloat16)
        res = jnp.pad(res, ((0, 0), (0, 0), (0, Cout_pad - Cout)))
        args.append(res)
        in_specs.append(pl.BlockSpec((None, Ho * Wo, Cout_pad),
                                     lambda n: (n, 0, 0)))

    flops = 2 * N * Ho * Wo * 9 * Cin * Cout_pad
    bytes_accessed = (xp.size * 2 + w.size * 2
                      + N * Ho * Wo * Cout_pad * jnp.dtype(out_dtype).itemsize
                      + (N * Ho * Wo * Cout_pad * 2 if has_res else 0))

    out = pl.pallas_call(
        _make_implicit_conv_kernel(apply_relu, has_res),
        out_shape=jax.ShapeDtypeStruct((N, Ho * Wo, Cout_pad), out_dtype),
        grid_spec=pltpu.PrefetchScalarGridSpec(
            num_scalar_prefetch=0,
            grid=(N,),
            in_specs=in_specs,
            out_specs=pl.BlockSpec((None, Ho * Wo, Cout_pad),
                                   lambda n: (n, 0, 0)),
            scratch_shapes=[],
        ),
        compiler_params=pltpu.CompilerParams(
            dimension_semantics=("parallel",),
            vmem_limit_bytes=vmem_limit),
        cost_estimate=pl.CostEstimate(flops=int(flops), transcendentals=0,
                                      bytes_accessed=int(bytes_accessed)),
    )(*args)

    return out[:, :, :Cout].reshape(N, Ho, Wo, Cout)


# ---------------------------------------------------------------------------
# Kernel B: im2col-matmul conv + folded BN (+residual)(+ReLU)
#   used for strided 3x3 convs and 1x1 downsample convs.
# ---------------------------------------------------------------------------
def _make_matmul_kernel_single_k(apply_relu: bool, has_residual: bool):
    # Whole K fits one tile: no accumulator scratch, no init/finalize phases.
    def kernel(*refs):
        if has_residual:
            p_ref, w_ref, s_ref, b_ref, r_ref, o_ref = refs
        else:
            p_ref, w_ref, s_ref, b_ref, o_ref = refs
        y = jnp.dot(p_ref[...], w_ref[...], preferred_element_type=jnp.float32)
        y = y * s_ref[...] + b_ref[...]
        if has_residual:
            y = y + r_ref[...].astype(jnp.float32)
        if apply_relu:
            y = jnp.maximum(y, 0.0)
        o_ref[...] = y.astype(o_ref.dtype)
    return kernel


def _make_matmul_kernel_multi_k(apply_relu: bool, has_residual: bool):
    # K tiled (reduction axis last); weights are fully VMEM-resident and
    # sliced in-kernel; first K tile stores directly (no zero-init RMW).
    def kernel(*refs):
        if has_residual:
            p_ref, w_ref, s_ref, b_ref, r_ref, o_ref, acc_ref = refs
        else:
            p_ref, w_ref, s_ref, b_ref, o_ref, acc_ref = refs

        k = pl.program_id(1)
        tk = p_ref.shape[1]
        koff = pl.multiple_of(k * tk, tk)
        part = jnp.dot(p_ref[...], w_ref[pl.ds(koff, tk), :],
                       preferred_element_type=jnp.float32)

        @pl.when(k == 0)
        def _():
            acc_ref[...] = part

        @pl.when(k > 0)
        def _():
            acc_ref[...] += part

        @pl.when(k == pl.num_programs(1) - 1)
        def _():
            y = acc_ref[...] * s_ref[...] + b_ref[...]
            if has_residual:
                y = y + r_ref[...].astype(jnp.float32)
            if apply_relu:
                y = jnp.maximum(y, 0.0)
            o_ref[...] = y.astype(o_ref.dtype)

    return kernel


def _im2col(x_nhwc, ksize, stride, padding):
    N, H, W, C = x_nhwc.shape
    Ho = (H + 2 * padding - ksize) // stride + 1
    Wo = (W + 2 * padding - ksize) // stride + 1
    xp = jnp.pad(x_nhwc, ((0, 0), (padding, padding), (padding, padding), (0, 0)))
    cols = []
    for dy in range(ksize):
        for dx in range(ksize):
            cols.append(xp[:, dy:dy + stride * Ho:stride,
                           dx:dx + stride * Wo:stride, :])
    patches = jnp.concatenate(cols, axis=-1)              # (N, Ho, Wo, k*k*C)
    return patches.reshape(N * Ho * Wo, ksize * ksize * C), (N, Ho, Wo)


def _choose_tiles(M, K, Cout_pad, budget):
    # K: single full-width tile unless K is genuinely large (no K padding then).
    if K <= 2048:
        TK, K_pad = K, K
    else:
        TK = 512                                   # 128-multiple, divides K_pad
        K_pad = _round_up(K, TK)
    k_tiles = K_pad // TK

    def vmem_bytes(tm):
        b = 2 * tm * max(TK, 128) * 2              # patches tile, bf16, double-buffered
        if k_tiles == 1:
            b += 2 * TK * Cout_pad * 2             # weight tile, bf16
        else:
            b += K_pad * Cout_pad * 2              # full weight matrix, resident
            b += tm * Cout_pad * 4                 # f32 accumulator scratch
        b += 2 * tm * Cout_pad * 2                 # output tile, bf16, double-buffered
        b += 2 * tm * Cout_pad * 2                 # residual tile (worst case), bf16
        b += 4 * Cout_pad * 4                      # BN scale / bias
        return b

    TM = 2048
    while TM > 16 and vmem_bytes(TM) > budget:
        TM //= 2

    # Prefer >= 2 M tiles so the "parallel" M axis can span both v7x TCs.
    if M <= TM:
        if M >= 32:
            TM = _round_up(pl.cdiv(M, 2), 16)
        else:
            TM = _round_up(max(M, 8), 8)
    M_pad = _round_up(M, TM)
    return TM, M_pad, TK, K_pad, k_tiles


def _conv_bn_im2col_pallas(x_nhwc, w_hwio, bn, *, stride, padding, ksize,
                           apply_relu, residual, out_dtype, budget, vmem_limit):
    # Cast once (before any im2col blowup); for 1x1 there is no blowup at all.
    patches, (N, Ho, Wo) = _im2col(x_nhwc.astype(jnp.bfloat16),
                                   ksize, stride, padding)
    M, K = patches.shape
    Cout = w_hwio.shape[-1]
    Cout_pad = _round_up(Cout, 128)
    TM, M_pad, TK, K_pad, k_tiles = _choose_tiles(M, K, Cout_pad, budget)

    patches = jnp.pad(patches, ((0, M_pad - M), (0, K_pad - K)))
    wmat = jnp.pad(w_hwio.reshape(-1, Cout).astype(jnp.bfloat16),
                   ((0, K_pad - K), (0, Cout_pad - Cout)))
    scale, bias = _fold_bn(bn)
    scale = jnp.pad(scale, ((0, 0), (0, Cout_pad - Cout)), constant_values=1.0)
    bias = jnp.pad(bias, ((0, 0), (0, Cout_pad - Cout)))

    has_res = residual is not None
    args = [patches, wmat, scale, bias]

    if k_tiles == 1:
        grid = (M_pad // TM,)
        in_specs = [
            pl.BlockSpec((TM, TK), lambda i: (i, 0)),            # patches tile
            pl.BlockSpec((K_pad, Cout_pad), lambda i: (0, 0)),   # weights (VMEM-resident)
            pl.BlockSpec((1, Cout_pad), lambda i: (0, 0)),       # BN scale
            pl.BlockSpec((1, Cout_pad), lambda i: (0, 0)),       # BN bias
        ]
        res_spec = pl.BlockSpec((TM, Cout_pad), lambda i: (i, 0))
        out_spec = pl.BlockSpec((TM, Cout_pad), lambda i: (i, 0))
        scratch = []
        kernel = _make_matmul_kernel_single_k(apply_relu, has_res)
        sems = ("parallel",)
    else:
        grid = (M_pad // TM, k_tiles)
        in_specs = [
            pl.BlockSpec((TM, TK), lambda i, k: (i, k)),          # patches tile
            pl.BlockSpec((K_pad, Cout_pad), lambda i, k: (0, 0)), # full weights, resident
            pl.BlockSpec((1, Cout_pad), lambda i, k: (0, 0)),
            pl.BlockSpec((1, Cout_pad), lambda i, k: (0, 0)),
        ]
        res_spec = pl.BlockSpec((TM, Cout_pad), lambda i, k: (i, 0))
        out_spec = pl.BlockSpec((TM, Cout_pad), lambda i, k: (i, 0))
        scratch = [pltpu.VMEM((TM, Cout_pad), jnp.float32)]
        kernel = _make_matmul_kernel_multi_k(apply_relu, has_res)
        sems = ("parallel", "arbitrary")

    if has_res:
        res = residual.reshape(M, Cout).astype(jnp.bfloat16)      # bf16 residual stream
        res = jnp.pad(res, ((0, M_pad - M), (0, Cout_pad - Cout)))
        args.append(res)
        in_specs.append(res_spec)

    flops = 2 * M_pad * K_pad * Cout_pad
    bytes_accessed = (patches.size * 2 + wmat.size * 2
                      + M_pad * Cout_pad * jnp.dtype(out_dtype).itemsize
                      + (M_pad * Cout_pad * 2 if has_res else 0))

    out = pl.pallas_call(
        kernel,
        out_shape=jax.ShapeDtypeStruct((M_pad, Cout_pad), out_dtype),
        grid_spec=pltpu.PrefetchScalarGridSpec(
            num_scalar_prefetch=0,
            grid=grid,
            in_specs=in_specs,
            out_specs=out_spec,
            scratch_shapes=scratch,
        ),
        compiler_params=pltpu.CompilerParams(
            dimension_semantics=sems,
            vmem_limit_bytes=vmem_limit),
        cost_estimate=pl.CostEstimate(flops=int(flops), transcendentals=0,
                                      bytes_accessed=int(bytes_accessed)),
    )(*args)

    return out[:M, :Cout].reshape(N, Ho, Wo, Cout)


# ---------------------------------------------------------------------------
# Dispatcher
# ---------------------------------------------------------------------------
def conv_bn_pallas(x_nhwc, w_hwio, bn, *, stride, padding, ksize,
                   apply_relu, residual=None, out_dtype=jnp.bfloat16):
    budget, vmem_limit = _vmem_caps()
    N, H, W, Cin = x_nhwc.shape
    Cout = w_hwio.shape[-1]

    if ksize == 3 and stride == 1 and padding == 1:
        Ho, Wo = H, W
        Cout_pad = _round_up(Cout, 128)
        fits = (_implicit_vmem_bytes(H + 2, W + 2, Cin, Ho, Wo, Cout_pad,
                                     residual is not None) <= budget)
        if Wo % 8 == 0 and fits:
            return _conv3x3_s1_bn_pallas(
                x_nhwc, w_hwio, bn, apply_relu=apply_relu, residual=residual,
                out_dtype=out_dtype, vmem_limit=vmem_limit)

    return _conv_bn_im2col_pallas(
        x_nhwc, w_hwio, bn, stride=stride, padding=padding, ksize=ksize,
        apply_relu=apply_relu, residual=residual, out_dtype=out_dtype,
        budget=budget, vmem_limit=vmem_limit)


# ---------------------------------------------------------------------------
# Parameter init (deterministic, matches nn.Module shapes) + forward
# ---------------------------------------------------------------------------
def init_basic_block(key, in_channels, out_channels, stride=1, downsample=False):
    ks = jax.random.split(key, 6)

    def conv_w(k, cout, cin, ksz):
        # PyTorch layout (Cout, Cin, kh, kw) -> HWIO for the kernel.
        w = 0.1 * jax.random.normal(k, (cout, cin, ksz, ksz), jnp.float32)
        return jnp.transpose(w, (2, 3, 1, 0))

    def bn_params(k, c):
        k1, k2, k3 = jax.random.split(k, 3)
        gamma = 1.0 + 0.1 * jax.random.normal(k1, (c,), jnp.float32)
        beta = 0.1 * jax.random.normal(k2, (c,), jnp.float32)
        mean = 0.1 * jax.random.normal(k3, (c,), jnp.float32)
        var = 0.9 * jnp.ones((c,), jnp.float32)
        return (gamma, beta, mean, var)

    params = {
        "conv1": conv_w(ks[0], out_channels, in_channels, 3),
        "bn1": bn_params(ks[1], out_channels),
        "conv2": conv_w(ks[2], out_channels, out_channels, 3),
        "bn2": bn_params(ks[3], out_channels),
        "stride": stride,
    }
    if downsample:
        params["ds_conv"] = conv_w(ks[4], out_channels, in_channels, 1)
        params["ds_bn"] = bn_params(ks[5], out_channels)
    return params


def basic_block_forward(params, x_nchw):
    # NCHW at the boundary (PyTorch convention), NHWC internally.
    x = jnp.transpose(x_nchw, (0, 2, 3, 1))
    stride = params["stride"]

    if "ds_conv" in params:
        # downsample branch: 1x1 strided conv + BN, emitted in bf16 so the
        # residual stream stays bf16 end-to-end (epilogue add is f32).
        ident = conv_bn_pallas(x, params["ds_conv"], params["ds_bn"],
                               stride=stride, padding=0, ksize=1,
                               apply_relu=False, out_dtype=jnp.bfloat16)
    else:
        assert stride == 1 and x.shape[-1] == params["conv1"].shape[-1], \
            "identity shortcut requires stride==1 and Cin==Cout"
        ident = x.astype(jnp.bfloat16)            # residual carried in bf16

    # conv1 -> bn1 -> relu  (bf16 intermediate halves its HBM round trip)
    h = conv_bn_pallas(x, params["conv1"], params["bn1"],
                       stride=stride, padding=1, ksize=3,
                       apply_relu=True, out_dtype=jnp.bfloat16)
    # conv2 -> bn2 -> (+identity) -> relu, fused; bf16 writeback.
    out = conv_bn_pallas(h, params["conv2"], params["bn2"],
                         stride=1, padding=1, ksize=3,
                         apply_relu=True, residual=ident,
                         out_dtype=jnp.bfloat16)
    return jnp.transpose(out, (0, 3, 1, 2)).astype(jnp.float32)   # back to NCHW


# ---------------------------------------------------------------------------
# Pure-JAX (f32) reference for correctness checking
# ---------------------------------------------------------------------------
def _ref_conv(x_nhwc, w_hwio, stride, padding):
    return jax.lax.conv_general_dilated(
        x_nhwc, w_hwio, (stride, stride),
        [(padding, padding), (padding, padding)],
        dimension_numbers=("NHWC", "HWIO", "NHWC"))


def reference_forward(params, x_nchw, eps=1e-5):
    x = jnp.transpose(x_nchw, (0, 2, 3, 1))

    def bn(y, p):
        g, b, m, v = p
        return (y - m) / jnp.sqrt(v + eps) * g + b

    s = params["stride"]
    if "ds_conv" in params:
        ident = bn(_ref_conv(x, params["ds_conv"], s, 0), params["ds_bn"])
    else:
        ident = x
    h = jax.nn.relu(bn(_ref_conv(x, params["conv1"], s, 1), params["bn1"]))
    o = bn(_ref_conv(h, params["conv2"], 1, 1), params["bn2"]) + ident
    o = jax.nn.relu(o)
    return jnp.transpose(o, (0, 3, 1, 2))


if __name__ == "__main__":
    key = jax.random.PRNGKey(0)
    k_x, k_p1, k_p2 = jax.random.split(key, 3)

    # Config 1: strided block with 1x1 downsample shortcut
    #   (conv1: im2col fallback [stride 2], conv2: implicit im2col, ds: 1x1).
    N, Cin, H, W = 2, 4, 16, 16
    Cout, stride = 8, 2
    x1 = jax.random.normal(k_x, (N, Cin, H, W), jnp.float32)
    p1 = init_basic_block(k_p1, Cin, Cout, stride=stride, downsample=True)
    out1 = jax.block_until_ready(basic_block_forward(p1, x1))
    assert out1.shape == (N, Cout, H // stride, W // stride), out1.shape
    err1 = float(jnp.max(jnp.abs(out1 - reference_forward(p1, x1))))
    # bf16 MXU operands / bf16 intermediates + residual vs pure-f32 reference.
    assert err1 < 7.5e-2, f"downsample block mismatch vs reference: {err1}"

    # Config 2: identity-shortcut block (stride 1, Cin == Cout):
    #   both 3x3 convs take the implicit-im2col path, residual is the input.
    C2 = 8
    x2 = jax.random.normal(k_x, (N, C2, H, W), jnp.float32)
    p2 = init_basic_block(k_p2, C2, C2, stride=1, downsample=False)
    out2 = jax.block_until_ready(basic_block_forward(p2, x2))
    assert out2.shape == (N, C2, H, W), out2.shape
    err2 = float(jnp.max(jnp.abs(out2 - reference_forward(p2, x2))))
    assert err2 < 7.5e-2, f"identity block mismatch vs reference: {err2}"

    print("KERNEL_OK")
</pallas_src>

<mosaic_0001>
module attributes {stable_mosaic.version = 11 : i64} {
  func.func @kernel(%arg0: i32, %arg1: memref<64x4xbf16, #tpu.memory_space<vmem>>, %arg2: memref<4x128xbf16, #tpu.memory_space<vmem>>, %arg3: memref<1x128xf32, #tpu.memory_space<vmem>>, %arg4: memref<1x128xf32, #tpu.memory_space<vmem>>, %arg5: memref<64x128xbf16, #tpu.memory_space<vmem>>) attributes {dimension_semantics = [#tpu.dimension_semantics<parallel>], iteration_bounds = array<i64: 2>, scalar_prefetch = 0 : i64, scratch_operands = 0 : i64, tpu.core_type = #tpu.core_type<tc>, window_params = [{transform_indices = @transform_0, window_bounds = array<i64: 64, 4>}, {pipeline_mode = #tpu.pipeline_mode<synchronous>, transform_indices = @transform_1, window_bounds = array<i64: 4, 128>}, {pipeline_mode = #tpu.pipeline_mode<synchronous>, transform_indices = @transform_2, window_bounds = array<i64: 1, 128>}, {pipeline_mode = #tpu.pipeline_mode<synchronous>, transform_indices = @transform_3, window_bounds = array<i64: 1, 128>}, {transform_indices = @transform_4, window_bounds = array<i64: 64, 128>}]} {
    %c0 = arith.constant 0 : index
    %c0_0 = arith.constant 0 : index
    %0 = vector.load %arg1[%c0, %c0_0] : memref<64x4xbf16, #tpu.memory_space<vmem>>, vector<64x4xbf16>
    %c0_1 = arith.constant 0 : index
    %c0_2 = arith.constant 0 : index
    %1 = vector.load %arg2[%c0_1, %c0_2] : memref<4x128xbf16, #tpu.memory_space<vmem>>, vector<4x128xbf16>
    %cst = arith.constant dense<0.000000e+00> : vector<64x128xf32>
    %2 = tpu.matmul %0, %1, %cst {dimension_numbers = #tpu.dot_dimension_numbers<[1], [0], [0], [1], [0, 0, 1, 1], [], []>} : vector<64x4xbf16>, vector<4x128xbf16>, vector<64x128xf32> -> vector<64x128xf32>
    %c0_3 = arith.constant 0 : index
    %c0_4 = arith.constant 0 : index
    %3 = vector.load %arg3[%c0_3, %c0_4] : memref<1x128xf32, #tpu.memory_space<vmem>>, vector<1x128xf32>
    %4 = vector.broadcast %3 : vector<1x128xf32> to vector<64x128xf32>
    %5 = arith.mulf %2, %4 : vector<64x128xf32>
    %c0_5 = arith.constant 0 : index
    %c0_6 = arith.constant 0 : index
    %6 = vector.load %arg4[%c0_5, %c0_6] : memref<1x128xf32, #tpu.memory_space<vmem>>, vector<1x128xf32>
    %7 = vector.broadcast %6 : vector<1x128xf32> to vector<64x128xf32>
    %8 = arith.addf %5, %7 : vector<64x128xf32>
    %9 = arith.truncf %8 : vector<64x128xf32> to vector<64x128xbf16>
    %c0_7 = arith.constant 0 : index
    %c0_8 = arith.constant 0 : index
    %10 = vector.load %arg5[%c0_7, %c0_8] : memref<64x128xbf16, #tpu.memory_space<vmem>>, vector<64x128xbf16>
    tpu.vector_store %arg5[%c0_7, %c0_8], %9 {strides = array<i32>} : memref<64x128xbf16, #tpu.memory_space<vmem>>, vector<64x128xbf16>,
    return
  }
  func.func @transform_0(%arg0: i32) -> (i32, i32) {
    %c0_i32 = arith.constant 0 : i32
    %c0_i32_0 = arith.constant 0 : i32
    return %arg0, %c0_i32 : i32, i32
  }
  func.func @transform_1(%arg0: i32) -> (i32, i32) {
    %c0_i32 = arith.constant 0 : i32
    %c0_i32_0 = arith.constant 0 : i32
    %c0_i32_1 = arith.constant 0 : i32
    return %c0_i32, %c0_i32_0 : i32, i32
  }
  func.func @transform_2(%arg0: i32) -> (i32, i32) {
    %c0_i32 = arith.constant 0 : i32
    %c0_i32_0 = arith.constant 0 : i32
    %c0_i32_1 = arith.constant 0 : i32
    return %c0_i32, %c0_i32_0 : i32, i32
  }
  func.func @transform_3(%arg0: i32) -> (i32, i32) {
    %c0_i32 = arith.constant 0 : i32
    %c0_i32_0 = arith.constant 0 : i32
    %c0_i32_1 = arith.constant 0 : i32
    return %c0_i32, %c0_i32_0 : i32, i32
  }
  func.func @transform_4(%arg0: i32) -> (i32, i32) {
    %c0_i32 = arith.constant 0 : i32
    %c0_i32_0 = arith.constant 0 : i32
    return %arg0, %c0_i32 : i32, i32
  }
}

</mosaic_0001>

<llo_original>
// kernel: tpu_custom_call.1
$region0: #{tpu_custom_call.1}
  #allocation0 [shape = 'u32[]', space=smem, size = 0x4, offset = 0x4, fixed_abs, tag = 'smem constant byte address 0x4 - core index']
  #allocation1 [shape = 'u32[72,128]{1,0:T(1,128)}', space=vmem, size = 0x9000, scoped, tag = 'internal scratch']
  %s0 = inlined_call_operand.vmem [shape: bf16[128,4], index: 0, kind: input, shape index: {}]
  %s1 = inlined_call_operand.vmem [shape: bf16[4,128], index: 1, kind: input, shape index: {}]
  %s2 = inlined_call_operand.vmem [shape: f32[1,128], index: 2, kind: input, shape index: {}]
  %s3 = inlined_call_operand.vmem [shape: f32[1,128], index: 3, kind: input, shape index: {}]
  %s4 = inlined_call_operand.hbm [shape: bf16[128,128], index: 4, kind: output, shape index: {}]
  %s5 = sld [smem:[#allocation0]]
  $region49: #{tpu_custom_call.1} parent=0
    _
  %s7 = ssub.s32 1, %s5
  %s8 = scalar_select 0, %s7, %s5
  $region1: #{tpu_custom_call.1} parent=0
    #allocation2 [shape = 'u8[32768]{0}', space=vmem, size = 0x8000, scoped, tag = 'output window, operand 0']
    #allocation3 [shape = 's32[2]{0}', space=sflag, size = 0x8, scoped, tag = 'scoped memory for tpu_custom_call.1']
    %9 = vsyncpa [#allocation3], 0
    %s10 = scalar_lea.sflag [#allocation3], 1
    %11 = vsyncpa %s10, 0
    loop: start=0, step=1, limit=4
    $region2: #{tpu_custom_call.1} parent=1 // loop_pre_header
      _
    $region3: #{tpu_custom_call.1} parent=1 // loop_header
      %s13 = sphi 0, %s17
      %p14 = scmp.ge.s32.totalorder %s13, 4
      %s23 = sphi 0, %s25
      %s26 = sphi 0, %s23
      %s27 = sphi 0, %s26
      %s43 = sphi 0, %s27
      %s47 = sphi 0, %s47
      %s49 = sphi 0, %s47
      %s50 = sphi 0, %s49
      %s64 = sphi 0, %s50
      %s68 = sphi 0, %s68
      %s70 = sphi 0, %s68
      %s71 = sphi 0, %s70
      %s85 = sphi 0, %s71
      %s89 = sphi 0, %s89
      %s91 = sphi 0, %s89
      %s92 = sphi 0, %s91
      %s106 = sphi 0, %s92
      %s112 = sphi 0, %s114
      %s115 = sphi 0, %s112
      %s116 = sphi 0, %s115
      %s132 = sphi 0, %s116
    $region4: #{tpu_custom_call.1} parent=1 // loop_header_branch
      %16 = sbr.rel (%p14) target = $region8
    $region5: #{tpu_custom_call.1} parent=1 // loop_body
      %s18 = ssub.s32 %s13, 1
      %s19 = ssub.s32 %s13, 2
      %s20 = sadd.s32 %s13, 1
      %s21 = ssub.s32 %s13, %s20
      %p22 = scmp.eq.s32.totalorder %s21, 0
      %s24 = sadd.s32 %s23, 1
      %s25 = scalar_select %p22, %s23, %s24
      %p28 = pneg %p22
      %p29 = scmp.eq.s32.totalorder %s13, 1
      %p30 = por %p28, %p29
      %p31 = scmp.ne.s32.totalorder %s23, %s26
      %p32 = scmp.eq.s32.totalorder %s13, 0
      %p33 = por %p31, %p32
      %p34 = scmp.ne.s32.totalorder %s23, %s26
      %p35 = scmp.eq.s32.totalorder %s18, 1
      %p36 = por %p34, %p35
      %p37 = scmp.ne.s32.totalorder %s26, %s27
      %p38 = scmp.eq.s32.totalorder %s18, 0
      %p39 = por %p37, %p38
      %p40 = scmp.ne.s32.totalorder %s26, %s27
      %p41 = scmp.eq.s32.totalorder %s19, 1
      %p42 = por %p40, %p41
      %p44 = scmp.ne.s32.totalorder %s27, %s43
      %p45 = scmp.eq.s32.totalorder %s19, 0
      %p46 = por %p44, %p45
      %s48 = sadd.s32 %s47, 1
      %p51 = scmp.eq.s32.totalorder %s13, 1
      %p52 = scmp.ne.s32.totalorder %s47, %s49
      %p53 = scmp.eq.s32.totalorder %s13, 0
      %p54 = por %p52, %p53
      %p55 = scmp.ne.s32.totalorder %s47, %s49
      %p56 = scmp.eq.s32.totalorder %s18, 1
      %p57 = por %p55, %p56
      %p58 = scmp.ne.s32.totalorder %s49, %s50
      %p59 = scmp.eq.s32.totalorder %s18, 0
      %p60 = por %p58, %p59
      %p61 = scmp.ne.s32.totalorder %s49, %s50
      %p62 = scmp.eq.s32.totalorder %s19, 1
      %p63 = por %p61, %p62
      %p65 = scmp.ne.s32.totalorder %s50, %s64
      %p66 = scmp.eq.s32.totalorder %s19, 0
      %p67 = por %p65, %p66
      %s69 = sadd.s32 %s68, 1
      %p72 = scmp.eq.s32.totalorder %s13, 1
      %p73 = scmp.ne.s32.totalorder %s68, %s70
      %p74 = scmp.eq.s32.totalorder %s13, 0
      %p75 = por %p73, %p74
      %p76 = scmp.ne.s32.totalorder %s68, %s70
      %p77 = scmp.eq.s32.totalorder %s18, 1
      %p78 = por %p76, %p77
      %p79 = scmp.ne.s32.totalorder %s70, %s71
      %p80 = scmp.eq.s32.totalorder %s18, 0
      %p81 = por %p79, %p80
      %p82 = scmp.ne.s32.totalorder %s70, %s71
      %p83 = scmp.eq.s32.totalorder %s19, 1
      %p84 = por %p82, %p83
      %p86 = scmp.ne.s32.totalorder %s71, %s85
      %p87 = scmp.eq.s32.totalorder %s19, 0
      %p88 = por %p86, %p87
      %s90 = sadd.s32 %s89, 1
      %p93 = scmp.eq.s32.totalorder %s13, 1
      %p94 = scmp.ne.s32.totalorder %s89, %s91
      %p95 = scmp.eq.s32.totalorder %s13, 0
      %p96 = por %p94, %p95
      %p97 = scmp.ne.s32.totalorder %s89, %s91
      %p98 = scmp.eq.s32.totalorder %s18, 1
      %p99 = por %p97, %p98
      %p100 = scmp.ne.s32.totalorder %s91, %s92
      %p101 = scmp.eq.s32.totalorder %s18, 0
      %p102 = por %p100, %p101
      %p103 = scmp.ne.s32.totalorder %s91, %s92
      %p104 = scmp.eq.s32.totalorder %s19, 1
      %p105 = por %p103, %p104
      %p107 = scmp.ne.s32.totalorder %s92, %s106
      %p108 = scmp.eq.s32.totalorder %s19, 0
      %p109 = por %p107, %p108
      %s110 = ssub.s32 %s13, %s20
      %p111 = scmp.eq.s32.totalorder %s110, 0
      %s113 = sadd.s32 %s112, 1
      %s114 = scalar_select %p111, %s112, %s113
      %p117 = pneg %p111
      %p118 = scmp.eq.s32.totalorder %s13, 1
      %p119 = por %p117, %p118
      %p120 = scmp.ne.s32.totalorder %s112, %s115
      %p121 = scmp.eq.s32.totalorder %s13, 0
      %p122 = por %p120, %p121
      %p123 = scmp.ne.s32.totalorder %s112, %s115
      %p124 = scmp.eq.s32.totalorder %s18, 1
      %p125 = por %p123, %p124
      %p126 = scmp.ne.s32.totalorder %s115, %s116
      %p127 = scmp.eq.s32.totalorder %s18, 0
      %p128 = por %p126, %p127
      %p129 = scmp.ne.s32.totalorder %s115, %s116
      %p130 = scmp.eq.s32.totalorder %s19, 1
      %p131 = por %p129, %p130
      %p133 = scmp.ne.s32.totalorder %s116, %s132
      %p134 = scmp.eq.s32.totalorder %s19, 0
      %p135 = por %p133, %p134
      %p136 = scmp.le.s32.totalorder 1, %s13
      %p137 = scmp.lt.s32.totalorder %s13, 3
      %p138 = pnand %p136, %p137
      %p139 = pneg %p138
      // Predicated region
      $region9: #{tpu_custom_call.1} parent=5 // pred_check
        _
      $region10: #{tpu_custom_call.1} parent=5 // pred_check_branch
        %141 = sbr.rel (%p138) target = $region12
      $region11: #{tpu_custom_call.1} parent=5 // pred_region
        %s142 = ssub.s32 %s13, 1
        // Predicated region
        $region13: #{tpu_custom_call.1} parent=11 // pred_check
          %p143 = pneg %p60
        $region14: #{tpu_custom_call.1} parent=11 // pred_check_branch
          %145 = sbr.rel (%p143) target = $region16
        $region15: #{tpu_custom_call.1} parent=11 // pred_region
          _
        $region16: #{tpu_custom_call.1} parent=11 // pred_fallthru
          _
        // Predicated region
        $region17: #{tpu_custom_call.1} parent=11 // pred_check
          %p146 = pneg %p81
        $region18: #{tpu_custom_call.1} parent=11 // pred_check_branch
          %148 = sbr.rel (%p146) target = $region20
        $region19: #{tpu_custom_call.1} parent=11 // pred_region
          _
        $region20: #{tpu_custom_call.1} parent=11 // pred_fallthru
          _
        // Predicated region
        $region21: #{tpu_custom_call.1} parent=11 // pred_check
          %p149 = pneg %p102
        $region22: #{tpu_custom_call.1} parent=11 // pred_check_branch
          %151 = sbr.rel (%p149) target = $region24
        $region23: #{tpu_custom_call.1} parent=11 // pred_region
          _
        $region24: #{tpu_custom_call.1} parent=11 // pred_fallthru
          _
      $region12: #{tpu_custom_call.1} parent=5 // pred_fallthru
        _
      %p152 = scmp.lt.s32.totalorder %s13, 2
      // Predicated region
      $region25: #{tpu_custom_call.1} parent=5 // pred_check
        %p153 = pneg %p152
      $region26: #{tpu_custom_call.1} parent=5 // pred_check_branch
        %155 = sbr.rel (%p153) target = $region28
      $region27: #{tpu_custom_call.1} parent=5 // pred_region
        // Predicated region
        $region29: #{tpu_custom_call.1} parent=27 // pred_check
          %p156 = pneg %p33
        $region30: #{tpu_custom_call.1} parent=27 // pred_check_branch
          %158 = sbr.rel (%p156) target = $region32
        $region31: #{tpu_custom_call.1} parent=27 // pred_region
          %s159 = smul.u32 8, %s13
          %p160 = scmp.lt.s32.totalorder %s159, 15
          %s161 = scalar_select %p160, %s159, 15
          %s162 = smul.addr %s161, 4
          %s163 = scalar_lea.vmem %s0, %s162
          %s164 = smul.u32 8, %s13
        $region32: #{tpu_custom_call.1} parent=27 // pred_fallthru
          _
      $region28: #{tpu_custom_call.1} parent=5 // pred_fallthru
        _
      %p165 = scmp.le.s32.totalorder 1, %s13
      %p166 = scmp.lt.s32.totalorder %s13, 3
      %p167 = pnand %p165, %p166
      %p168 = pneg %p167
      // Predicated region
      $region33: #{tpu_custom_call.1} parent=5 // pred_check
        _
      $region34: #{tpu_custom_call.1} parent=5 // pred_check_branch
        %170 = sbr.rel (%p167) target = $region36
      $region35: #{tpu_custom_call.1} parent=5 // pred_region
        %s171 = ssub.s32 %s13, 1
        %s172 = smul.u32 8, %s18
        %p173 = scmp.lt.s32.totalorder %s172, 15
        %s174 = scalar_select %p173, %s172, 15
        %s175 = smul.addr %s174, 4
        %s176 = scalar_lea.vmem %s0, %s175
        %p177 = pneg %p39
        %p178 = pneg %p36
        %p179 = pneg %p60
        %p180 = pneg %p57
        %p181 = pneg %p81
        %p182 = pneg %p78
        %p183 = pneg %p102
        %p184 = pneg %p99
        %p185 = pneg %p128
        %p186 = pneg %p125
        %s187 = sand.u32 %s115, 1
        %s188 = scalar_lea.sflag [#allocation3], %s187
        %s189 = sand.u32 %s115, 1
        %s190 = smul.addr %s189, 32
        %s191 = scalar_lea.vmem [#allocation2], %s190
        %s192 = smul.u32 8, %s18
        %p193 = scmp.lt.s32.totalorder %s192, 15
        %s194 = scalar_select %p193, %s192, 15
        %s195 = smul.addr %s194, 4
        %s196 = scalar_lea.vmem %s0, %s195
        %s197 = smul.u32 8, %s18
        %s198 = smul.u32 8, %s18
        %v200 = vld [vmem:[%s196] sm:$0xf]
        %v201 = vld [vmem:[%s196 + $0x4] sm:$0xf]
        %v202 = vld [vmem:[%s196 + $0x8] sm:$0xf]
        %v203 = vld [vmem:[%s196 + $0xc] sm:$0xf]
        %v204 = vld [vmem:[%s196 + $0x10] sm:$0xf]
        %v205 = vld [vmem:[%s196 + $0x14] sm:$0xf]
        %v206 = vld [vmem:[%s196 + $0x18] sm:$0xf]
        %v207 = vld [vmem:[%s196 + $0x1c] sm:$0xf]
        %v208 = vld [vmem:[%s1] sm:$0x3]
        %v217 = vunpack.c.l.b16 %v200
        %v218 = vunpack.c.l.b16 %v201
        %v219 = vunpack.c.l.b16 %v202
        %v220 = vunpack.c.l.b16 %v203
        %v221 = vunpack.c.l.b16 %v204
        %v222 = vunpack.c.l.b16 %v205
        %v223 = vunpack.c.l.b16 %v206
        %v224 = vunpack.c.l.b16 %v207
        %v225 = vpack.c.b16 %v218, %v217
        %v226 = vpack.c.b16 %v220, %v219
        %v227 = vpack.c.b16 %v222, %v221
        %v228 = vpack.c.b16 %v224, %v223
        %vm229 = vcmask 31744
        %v231 = vsel %vm229, %v225, 0
        %v234 = vsel %vm229, %v226, 0
        %v237 = vsel %vm229, %v227, 0
        %v240 = vsel %vm229, %v228, 0
        %vm242 = vcmask 1041408
        %v244 = vsel %vm242, %v208, 0
        %246 = vmatpush.bf16.msra.mxu0 0
        %247 = vmatpush.bf16.msra.mxu0 0
        %248 = vmatpush.bf16.msra.mxu0 0
        %249 = vmatpush.bf16.msra.mxu0 0
        %250 = vmatpush.bf16.msra.mxu0 0
        %251 = vmatpush.bf16.msra.mxu0 0
        %252 = vmatpush.bf16.msra.mxu0 0
        %253 = vmatpush.bf16.msra.mxu0 %v244
        %254 = vmatmul.bf16.gmra.mxu0 %v231
        %v255 = vpop.f32.mrf.mxu0
        %v256 = vadd.f32 0.0, %v255
        %v257 = vpop.f32.mrf.mxu0
        %v258 = vadd.f32 0.0, %v257
        %259 = vmatmul.bf16.gmra.mxu0 %v234
        %v260 = vpop.f32.mrf.mxu0
        %v261 = vadd.f32 0.0, %v260
        %v262 = vpop.f32.mrf.mxu0
        %v263 = vadd.f32 0.0, %v262
        %264 = vmatmul.bf16.gmra.mxu0 %v237
        %v265 = vpop.f32.mrf.mxu0
        %v266 = vadd.f32 0.0, %v265
        %v267 = vpop.f32.mrf.mxu0
        %v268 = vadd.f32 0.0, %v267
        %269 = vmatmul.bf16.gmra.mxu0 %v240
        %v270 = vpop.f32.mrf.mxu0
        %v271 = vadd.f32 0.0, %v270
        %v272 = vpop.f32.mrf.mxu0
        %v273 = vadd.f32 0.0, %v272
        %274 = vdwg.mxu0
        %v275 = vld [vmem:[%s2] sm:$0x1]
        %v277 = vperm.slane %v275, 0
        %v279 = vmul.f32 %v256, %v277
        %v280 = vmul.f32 %v258, %v277
        %v281 = vmul.f32 %v261, %v277
        %v282 = vmul.f32 %v263, %v277
        %v283 = vmul.f32 %v266, %v277
        %v284 = vmul.f32 %v268, %v277
        %v285 = vmul.f32 %v271, %v277
        %v286 = vmul.f32 %v273, %v277
        %v287 = vld [vmem:[%s3] sm:$0x1]
        %v289 = vperm.slane %v287, 0
        %v291 = vadd.f32 %v279, %v289
        %v292 = vadd.f32 %v280, %v289
        %v293 = vadd.f32 %v281, %v289
        %v294 = vadd.f32 %v282, %v289
        %v295 = vadd.f32 %v283, %v289
        %v296 = vadd.f32 %v284, %v289
        %v297 = vadd.f32 %v285, %v289
        %v298 = vadd.f32 %v286, %v289
        %v299 = vpack.c.bf16 %v291, %v291
        %v300 = vpack.c.bf16 %v292, %v292
        %v301 = vpack.c.bf16 %v293, %v293
        %v302 = vpack.c.bf16 %v294, %v294
        %v303 = vpack.c.bf16 %v295, %v295
        %v304 = vpack.c.bf16 %v296, %v296
        %v305 = vpack.c.bf16 %v297, %v297
        %v306 = vpack.c.bf16 %v298, %v298
        %307 = vst [vmem:[%s191] sm:$0xf] %v299
        %308 = vst [vmem:[%s191 + $0x4] sm:$0xf] %v300
        %309 = vst [vmem:[%s191 + $0x8] sm:$0xf] %v301
        %310 = vst [vmem:[%s191 + $0xc] sm:$0xf] %v302
        %311 = vst [vmem:[%s191 + $0x10] sm:$0xf] %v303
        %312 = vst [vmem:[%s191 + $0x14] sm:$0xf] %v304
        %313 = vst [vmem:[%s191 + $0x18] sm:$0xf] %v305
        %314 = vst [vmem:[%s191 + $0x1c] sm:$0xf] %v306
        %s315 = sand.u32 %s115, 1
        %s316 = scalar_lea.sflag [#allocation3], %s315
        %s317 = sand.u32 %s115, 1
        %s318 = smul.addr %s317, 32
        %s319 = scalar_lea.vmem [#allocation2], %s318
        // Predicated region
        $region37: #{tpu_custom_call.1} parent=35 // pred_check
          %p320 = pneg %p125
        $region38: #{tpu_custom_call.1} parent=35 // pred_check_branch
          %322 = sbr.rel (%p320) target = $region40
        $region39: #{tpu_custom_call.1} parent=35 // pred_region
          %s323 = smul.u32 8, %s18
          %325 = vsyncadd %s316, 0
          %s326 = smul.addr %s323, 4
          %s327 = scalar_lea.hbm %s4, %s326
          %s328 = sshll.u32 %s319, 4
          %s329 = int_to_ptr.vmem [resolvable:$true] %s328
          %s330 = sshll.u32 %s327, 4
          %s331 = int_to_ptr.hbm [resolvable:$true] %s330
          %336 = dma.vmem_to_hbm [thread:$0]  %s329, 512, %s331, %s316, 64, 64, 4
        $region40: #{tpu_custom_call.1} parent=35 // pred_fallthru
          _
      $region36: #{tpu_custom_call.1} parent=5 // pred_fallthru
        _
      %p337 = scmp.le.s32.totalorder 2, %s13
      // Predicated region
      $region41: #{tpu_custom_call.1} parent=5 // pred_check
        %p338 = pneg %p337
      $region42: #{tpu_custom_call.1} parent=5 // pred_check_branch
        %340 = sbr.rel (%p338) target = $region44
      $region43: #{tpu_custom_call.1} parent=5 // pred_region
        %s341 = ssub.s32 %s13, 2
        // Predicated region
        $region45: #{tpu_custom_call.1} parent=43 // pred_check
          %p342 = pneg %p131
        $region46: #{tpu_custom_call.1} parent=43 // pred_check_branch
          %344 = sbr.rel (%p342) target = $region48
        $region47: #{tpu_custom_call.1} parent=43 // pred_region
          %s345 = sand.u32 %s116, 1
          %s346 = scalar_lea.sflag [#allocation3], %s345
          %s347 = sand.u32 %s116, 1
          %s348 = smul.addr %s347, 32
          %s349 = scalar_lea.vmem [#allocation2], %s348
          %351 = dma.done %s346, 512
        $region48: #{tpu_custom_call.1} parent=43 // pred_fallthru
          _
      $region44: #{tpu_custom_call.1} parent=5 // pred_fallthru
        _
    $region6: #{tpu_custom_call.1} parent=1 // loop_footer
      %s17 = sadd.s32 1, %s13
    $region7: #{tpu_custom_call.1} parent=1 // loop_footer_branch
      %12 = sbr.rel target = $region3
    $region8: #{tpu_custom_call.1} parent=1 // loop_exit
      _
    %352 = vsyncpa [#allocation3], 1
    %s353 = scalar_lea.sflag [#allocation3], 1
    %354 = vsyncpa %s353, 1

</llo_original>
